<compile_context>
chip_gen: v5e
topology: v5e:2x2
jax: 0.10.0
libtpu: 0.0.40
codegen_flags: <defaults>
</compile_context>

<pallas_src>
import functools

import jax
import jax.numpy as jnp
from jax.experimental import pallas as pl
from jax.experimental.pallas import tpu as pltpu


# ---------------------------------------------------------------------------
# Pallas kernel: fused-tap conv matmul (+ bias, + optional LeakyReLU)
# ---------------------------------------------------------------------------
def _conv_mm_kernel(w_ref, a_ref, b_ref, o_ref, *, alpha):
    # w_ref: (Cout, K)     fused weights, K = Cin*KD*KH*KW (resident)
    # a_ref: (1, K, TM)    im2col patch block for this (batch, M-tile)
    # b_ref: (Cout, 1)     bias (zeros when the layer has no bias, resident)
    # o_ref: (1, Cout, TM) lane-dense output block (TM on the 128-lane axis)
    y = jnp.dot(w_ref[...], a_ref[0], preferred_element_type=jnp.float32)
    y = y + b_ref[...]
    if alpha is not None:
        y = jnp.where(y >= 0, y, jnp.float32(alpha) * y)
    o_ref[0] = y.astype(o_ref.dtype)


def _choose_tile_m(M, K, itemsize, budget_bytes=4 * 1024 * 1024):
    """Largest TM that divides M, is a multiple of 128, and keeps one (K, TM)
    input block under `budget_bytes`, so double-buffered tiles fit the default
    scoped VMEM on v5e (16 MiB) / v6e / v7x (32 MiB).  Falls back to full M."""
    if M * K * itemsize <= budget_bytes:
        return M
    tm = (budget_bytes // (K * itemsize)) // 128 * 128
    tm = min(tm, (M // 128) * 128)
    while tm >= 128:
        if M % tm == 0:
            return tm
        tm -= 128
    return M


def conv3d_pallas(x, weight, bias=None, *, stride=1, padding=0, alpha=None,
                  use_bf16=False):
    """3-D convolution (NCDHW in/out, OIDHW weights) as one fused MXU matmul.

    Equivalent to nn.Conv3d(stride, padding) [+ LeakyReLU(alpha) if alpha].
    `use_bf16=True` casts the matmul operands to bf16 (v6e/v7x fast path)
    while accumulating in f32.
    """
    out_dtype = x.dtype
    N, Cin, D, H, W = x.shape
    Cout, Cin_w, KD, KH, KW = weight.shape
    assert Cin == Cin_w
    s, p = stride, padding
    if p:
        x = jnp.pad(x, ((0, 0), (0, 0), (p, p), (p, p), (p, p)))
    Dp, Hp, Wp = D + 2 * p, H + 2 * p, W + 2 * p
    Do, Ho, Wo = (Dp - KD) // s + 1, (Hp - KH) // s + 1, (Wp - KW) // s + 1
    M = Do * Ho * Wo
    K = Cin * KD * KH * KW

    # --- wrapper glue (no FLOPs): im2col with the tap axis fused into the
    # contraction and M on the lane axis  -> a: (N, K, M), w: (Cout, K).
    # Contraction index order is (cin, kd, kh, kw) for both operands.
    # TODO(synk): at very large volumes, gather the taps in-kernel (manual DMA
    # over the padded input) instead of materializing the K-x im2col in HBM.
    taps = []
    for kd in range(KD):
        for kh in range(KH):
            for kw in range(KW):
                sl = x[:, :,
                       kd:kd + (Do - 1) * s + 1:s,
                       kh:kh + (Ho - 1) * s + 1:s,
                       kw:kw + (Wo - 1) * s + 1:s]
                taps.append(sl.reshape(N, Cin, M))
    a = jnp.stack(taps, axis=2).reshape(N, K, M)     # index = cin*T + tap
    w = weight.reshape(Cout, K)                      # same (cin,kd,kh,kw) order
    if bias is None:
        bias = jnp.zeros((Cout,), jnp.float32)
    b = bias.astype(jnp.float32).reshape(Cout, 1)

    cdt = jnp.bfloat16 if use_bf16 else a.dtype
    a = a.astype(cdt)
    w = w.astype(cdt)

    TM = _choose_tile_m(M, K, jnp.dtype(cdt).itemsize)
    grid = (N, M // TM)

    out = pl.pallas_call(
        functools.partial(_conv_mm_kernel, alpha=alpha),
        out_shape=jax.ShapeDtypeStruct((N, Cout, M), out_dtype),
        grid_spec=pltpu.PrefetchScalarGridSpec(
            num_scalar_prefetch=0,
            grid=grid,
            in_specs=[
                pl.BlockSpec((Cout, K), lambda n, m: (0, 0)),      # resident
                pl.BlockSpec((1, K, TM), lambda n, m: (n, 0, m)),
                pl.BlockSpec((Cout, 1), lambda n, m: (0, 0)),      # resident
            ],
            out_specs=pl.BlockSpec((1, Cout, TM), lambda n, m: (n, 0, m)),
        ),
        compiler_params=pltpu.CompilerParams(
            dimension_semantics=("parallel", "parallel")),
    )(w, a, b)

    # (N, Cout, M) is already NCDHW after a reshape -> no output transpose.
    return out.reshape(N, Cout, Do, Ho, Wo)


# ---------------------------------------------------------------------------
# Module glue (matches the PyTorch reference exactly)
# ---------------------------------------------------------------------------
def custom_padding_3d(x):
    # F.pad(x, [1]*6) then x[:, :, 1:, 1:, 1:]  ==  pad (0, 1) on D, H, W.
    return jnp.pad(x, ((0, 0), (0, 0), (0, 1), (0, 1), (0, 1)))


def affine_flow(W, b, len1, len2, len3):
    b = b.reshape(-1, 1, 1, 1, 3)
    xr = jnp.arange(-(len1 - 1) / 2.0, len1 / 2.0, 1.0, dtype=jnp.float32)
    xr = xr.reshape(1, -1, 1, 1, 1)
    yr = jnp.arange(-(len2 - 1) / 2.0, len2 / 2.0, 1.0, dtype=jnp.float32)
    yr = yr.reshape(1, 1, -1, 1, 1)
    zr = jnp.arange(-(len3 - 1) / 2.0, len3 / 2.0, 1.0, dtype=jnp.float32)
    zr = zr.reshape(1, 1, 1, -1, 1)
    wx = W[:, :, 0].reshape(-1, 1, 1, 1, 3)
    wy = W[:, :, 1].reshape(-1, 1, 1, 1, 3)
    wz = W[:, :, 2].reshape(-1, 1, 1, 1, 3)
    return xr * wx + yr * wy + (zr * wz + b)


def det3x3(M):
    return (M[:, 0, 0] * M[:, 1, 1] * M[:, 2, 2]
            + M[:, 0, 1] * M[:, 1, 2] * M[:, 2, 0]
            + M[:, 0, 2] * M[:, 1, 0] * M[:, 2, 1]
            - (M[:, 0, 0] * M[:, 1, 2] * M[:, 2, 1]
               + M[:, 0, 1] * M[:, 1, 0] * M[:, 2, 2]
               + M[:, 0, 2] * M[:, 1, 1] * M[:, 2, 0]))


def elem_sym_polys_of_eigen_values(M):
    s1 = M[:, 0, 0] + M[:, 1, 1] + M[:, 2, 2]
    s2 = (M[:, 0, 0] * M[:, 1, 1] + M[:, 1, 1] * M[:, 2, 2]
          + M[:, 2, 2] * M[:, 0, 0]
          - (M[:, 0, 1] * M[:, 1, 0] + M[:, 1, 2] * M[:, 2, 1]
             + M[:, 2, 0] * M[:, 0, 2]))
    s3 = det3x3(M)
    return s1, s2, s3


# (cin, cout, ksize, stride, padding, has_bias, leakyrelu_alpha) per layer,
# matching VTNAffine_CustomPadding.__init__.
def vtn_affine_layer_cfg(channels=16):
    c = channels
    return (
        (2,      c,      3, 2, 0, True, 0.1),
        (c,      2 * c,  3, 2, 0, True, 0.1),
        (2 * c,  4 * c,  3, 2, 0, True, 0.1),
        (4 * c,  4 * c,  3, 1, 1, True, 0.1),
        (4 * c,  8 * c,  3, 2, 0, True, 0.1),
        (8 * c,  8 * c,  3, 1, 1, True, 0.1),
        (8 * c,  16 * c, 3, 2, 0, True, 0.1),
        (16 * c, 16 * c, 3, 1, 1, True, 0.1),
        (16 * c, 32 * c, 3, 2, 0, True, 0.1),
        (32 * c, 32 * c, 3, 1, 1, True, 0.1),
        (32 * c, 9,      2, 1, 0, False, None),
        (32 * c, 3,      2, 1, 0, False, None),
    )


def init_vtn_affine_params(key, cfg):
    params = []
    for k_, (cin, cout, ks, _, _, has_bias, _) in zip(
            jax.random.split(key, len(cfg)), cfg):
        kw_, kb_ = jax.random.split(k_)
        fan_in = cin * ks ** 3
        bound = 1.0 / fan_in ** 0.5
        wgt = jax.random.uniform(kw_, (cout, cin, ks, ks, ks), jnp.float32,
                                 -bound, bound)
        bs = (jax.random.uniform(kb_, (cout,), jnp.float32, -bound, bound)
              if has_bias else None)
        params.append({"w": wgt, "b": bs})
    return params


def conv_layer_pallas(x, p, layer_cfg):
    _, _, _, s, pad, _, alpha = layer_cfg
    return conv3d_pallas(x, p["w"], p["b"], stride=s, padding=pad, alpha=alpha)


def conv_layer_xla(x, p, layer_cfg):
    _, _, _, s, pad, _, alpha = layer_cfg
    y = jax.lax.conv_general_dilated(
        x, p["w"], window_strides=(s,) * 3, padding=[(pad, pad)] * 3,
        dimension_numbers=("NCDHW", "OIDHW", "NCDHW"))
    if p["b"] is not None:
        y = y + p["b"][None, :, None, None, None]
    if alpha is not None:
        y = jnp.where(y >= 0, y, alpha * y)
    return y


def vtn_affine_forward(x, params, *, cfg, conv_fn, flow_multiplier=1.0):
    """Forward pass of VTNAffine_CustomPadding (same returned dict)."""
    sx, sy, sz = x.shape[2:5]

    h = custom_padding_3d(x)
    h = conv_fn(h, params[0], cfg[0])              # conv1
    h = custom_padding_3d(h)
    h = conv_fn(h, params[1], cfg[1])              # conv2
    h = custom_padding_3d(h)
    h = conv_fn(h, params[2], cfg[2])              # conv3
    h = conv_fn(h, params[3], cfg[3])              # conv3_1
    h = custom_padding_3d(h)
    h = conv_fn(h, params[4], cfg[4])              # conv4
    h = conv_fn(h, params[5], cfg[5])              # conv4_1
    h = custom_padding_3d(h)
    h = conv_fn(h, params[6], cfg[6])              # conv5
    h = conv_fn(h, params[7], cfg[7])              # conv5_1
    h = custom_padding_3d(h)
    h = conv_fn(h, params[8], cfg[8])              # conv6
    conv61 = conv_fn(h, params[9], cfg[9])         # conv6_1
    conv7W = conv_fn(conv61, params[10], cfg[10])  # 9-channel affine head
    conv7b = conv_fn(conv61, params[11], cfg[11])  # 3-channel offset head

    W = conv7W.reshape(-1, 3, 3) * flow_multiplier
    b = conv7b.reshape(-1, 3) * flow_multiplier
    I3 = jnp.eye(3, dtype=jnp.float32)
    A = W + I3[None]

    flow = jnp.transpose(affine_flow(W, b, sx, sy, sz), (0, 4, 1, 2, 3))
    det = det3x3(A)
    det_loss = jnp.sum((det - 1.0) ** 2) / 2.0
    eps = 1e-5
    C = jnp.matmul(jnp.transpose(A, (0, 2, 1)), A) + eps * I3[None]
    s1, s2, s3 = elem_sym_polys_of_eigen_values(C)
    ortho_loss = jnp.sum(s1 + (1 + eps) * (1 + eps) * s2 / s3
                         - 3 * 2 * (1 + eps))
    return {"flow": flow, "W": W, "b": b,
            "det_loss": det_loss, "ortho_loss": ortho_loss}


if __name__ == "__main__":
    root = jax.random.PRNGKey(0)
    k_ux, k_uw, k_ub, k_x, k_p = jax.random.split(root, 5)

    # ---- 1) unit check: the Pallas conv block vs XLA conv (f32 and bf16) ----
    N, Cin, Cout, S0, Ks = 2, 4, 8, 8, 3
    xu = jax.random.normal(k_ux, (N, Cin, S0, S0, S0), jnp.float32)
    bound = 1.0 / (Cin * Ks ** 3) ** 0.5
    wu = jax.random.uniform(k_uw, (Cout, Cin, Ks, Ks, Ks), jnp.float32,
                            -bound, bound)
    bu = jax.random.uniform(k_ub, (Cout,), jnp.float32, -bound, bound)
    unit_cfg = (Cin, Cout, Ks, 1, 1, True, 0.1)
    ref_u = conv_layer_xla(xu, {"w": wu, "b": bu}, unit_cfg)
    out_u = conv3d_pallas(xu, wu, bu, stride=1, padding=1, alpha=0.1)
    out_u = jax.block_until_ready(out_u)
    assert jnp.allclose(out_u, ref_u, atol=1e-4, rtol=1e-4)
    # bf16 MXU fast path (v6e/v7x), f32 accumulate -> looser tolerance.
    out_u_bf16 = conv3d_pallas(xu, wu, bu, stride=1, padding=1, alpha=0.1,
                               use_bf16=True)
    assert jnp.allclose(out_u_bf16, ref_u, atol=5e-2, rtol=5e-2)

    # ---- 2) full VTNAffine_CustomPadding forward ----------------------------
    # The architecture (6 stride-2 convs + a final 2^3 conv) requires a 128^3
    # input to collapse to 1^3 at the affine heads; channels=4 keeps it light.
    channels, S = 4, 128
    cfg = vtn_affine_layer_cfg(channels)
    params = init_vtn_affine_params(k_p, cfg)
    x = jax.random.normal(k_x, (1, 2, S, S, S), jnp.float32)

    fwd = jax.jit(functools.partial(vtn_affine_forward, cfg=cfg,
                                    conv_fn=conv_layer_pallas))
    fwd_ref = jax.jit(functools.partial(vtn_affine_forward, cfg=cfg,
                                        conv_fn=conv_layer_xla))

    out = jax.block_until_ready(fwd(x, params))
    ref = jax.block_until_ready(fwd_ref(x, params))

    assert out["flow"].shape == (1, 3, S, S, S)
    assert out["W"].shape == (1, 3, 3) and out["b"].shape == (1, 3)
    for name in ("flow", "W", "b", "det_loss", "ortho_loss"):
        assert jnp.allclose(out[name], ref[name], atol=1e-4, rtol=1e-3), name

    print("KERNEL_OK")
</pallas_src>

<mosaic_0001>
module attributes {stable_mosaic.version = 11 : i64} {
  func.func @_conv_mm_kernel(%arg0: i32, %arg1: i32, %arg2: memref<8x108xf32, #tpu.memory_space<vmem>>, %arg3: memref<1x108x512xf32, #tpu.memory_space<vmem>>, %arg4: memref<8x1xf32, #tpu.memory_space<vmem>>, %arg5: memref<1x8x512xf32, #tpu.memory_space<vmem>>) attributes {dimension_semantics = [#tpu.dimension_semantics<parallel>, #tpu.dimension_semantics<parallel>], iteration_bounds = array<i64: 2, 1>, scalar_prefetch = 0 : i64, scratch_operands = 0 : i64, tpu.core_type = #tpu.core_type<tc>, window_params = [{pipeline_mode = #tpu.pipeline_mode<synchronous>, transform_indices = @transform_0, window_bounds = array<i64: 8, 108>}, {transform_indices = @transform_1, window_bounds = array<i64: 1, 108, 512>}, {pipeline_mode = #tpu.pipeline_mode<synchronous>, transform_indices = @transform_2, window_bounds = array<i64: 8, 1>}, {transform_indices = @transform_3, window_bounds = array<i64: 1, 8, 512>}]} {
    %c0 = arith.constant 0 : index
    %c0_0 = arith.constant 0 : index
    %0 = vector.load %arg2[%c0, %c0_0] : memref<8x108xf32, #tpu.memory_space<vmem>>, vector<8x108xf32>
    %c0_1 = arith.constant 0 : index
    %c0_2 = arith.constant 0 : index
    %c0_3 = arith.constant 0 : index
    %1 = vector.load %arg3[%c0_1, %c0_2, %c0_3] : memref<1x108x512xf32, #tpu.memory_space<vmem>>, vector<1x108x512xf32>
    %2 = vector.shape_cast %1 : vector<1x108x512xf32> to vector<108x512xf32>
    %cst = arith.constant dense<0.000000e+00> : vector<8x512xf32>
    %3 = tpu.matmul %0, %2, %cst {dimension_numbers = #tpu.dot_dimension_numbers<[1], [0], [0], [1], [0, 0, 1, 1], [], []>} : vector<8x108xf32>, vector<108x512xf32>, vector<8x512xf32> -> vector<8x512xf32>
    %c0_4 = arith.constant 0 : index
    %c0_5 = arith.constant 0 : index
    %4 = vector.load %arg4[%c0_4, %c0_5] : memref<8x1xf32, #tpu.memory_space<vmem>>, vector<8x1xf32>
    %5 = vector.broadcast %4 : vector<8x1xf32> to vector<8x512xf32>
    %6 = arith.addf %3, %5 : vector<8x512xf32>
    %cst_6 = arith.constant 0.000000e+00 : f32
    %7 = vector.broadcast %cst_6 : f32 to vector<8x512xf32>
    %8 = arith.cmpf oge, %6, %7 : vector<8x512xf32>
    %cst_7 = arith.constant 1.000000e-01 : f32
    %9 = vector.broadcast %cst_7 : f32 to vector<8x512xf32>
    %10 = arith.mulf %9, %6 : vector<8x512xf32>
    %11 = arith.select %8, %6, %10 : vector<8x512xi1>, vector<8x512xf32>
    %c0_8 = arith.constant 0 : index
    %c0_9 = arith.constant 0 : index
    %c0_10 = arith.constant 0 : index
    %12 = vector.load %arg5[%c0_8, %c0_9, %c0_10] : memref<1x8x512xf32, #tpu.memory_space<vmem>>, vector<1x8x512xf32>
    %13 = vector.shape_cast %12 : vector<1x8x512xf32> to vector<8x512xf32>
    %14 = vector.shape_cast %11 : vector<8x512xf32> to vector<1x8x512xf32>
    tpu.vector_store %arg5[%c0_8, %c0_9, %c0_10], %14 {strides = array<i32>} : memref<1x8x512xf32, #tpu.memory_space<vmem>>, vector<1x8x512xf32>,
    return
  }
  func.func @transform_0(%arg0: i32, %arg1: i32) -> (i32, i32) {
    %c0_i32 = arith.constant 0 : i32
    %c0_i32_0 = arith.constant 0 : i32
    %c0_i32_1 = arith.constant 0 : i32
    return %c0_i32, %c0_i32_0 : i32, i32
  }
  func.func @transform_1(%arg0: i32, %arg1: i32) -> (i32, i32, i32) {
    %c0_i32 = arith.constant 0 : i32
    %c0_i32_0 = arith.constant 0 : i32
    return %arg0, %c0_i32, %arg1 : i32, i32, i32
  }
  func.func @transform_2(%arg0: i32, %arg1: i32) -> (i32, i32) {
    %c0_i32 = arith.constant 0 : i32
    %c0_i32_0 = arith.constant 0 : i32
    %c0_i32_1 = arith.constant 0 : i32
    return %c0_i32, %c0_i32_0 : i32, i32
  }
  func.func @transform_3(%arg0: i32, %arg1: i32) -> (i32, i32, i32) {
    %c0_i32 = arith.constant 0 : i32
    %c0_i32_0 = arith.constant 0 : i32
    return %arg0, %c0_i32, %arg1 : i32, i32, i32
  }
}

</mosaic_0001>

<llo_original>
// kernel: tpu_custom_call.1
$region0: #{tpu_custom_call.1}
  #allocation0 [shape = 'u32[]', space=smem, size = 0x4, offset = 0x4, fixed_abs, tag = 'smem constant byte address 0x4 - core index']
  #allocation1 [shape = 'u32[72,128]{1,0:T(1,128)}', space=vmem, size = 0x9000, scoped, tag = 'internal scratch']
  %s0 = inlined_call_operand.vmem [shape: f32[8,108], index: 0, kind: input, shape index: {}]
  %s1 = inlined_call_operand.vmem [shape: f32[2,108,512], index: 1, kind: input, shape index: {}]
  %s2 = inlined_call_operand.vmem [shape: f32[8,1], index: 2, kind: input, shape index: {}]
  %s3 = inlined_call_operand.hbm [shape: f32[2,8,512], index: 3, kind: output, shape index: {}]
  %s4 = sld [smem:[#allocation0]]
  $region45: #{tpu_custom_call.1} parent=0
    _
  %s6 = ssub.s32 1, %s4
  %s7 = scalar_select 0, %s6, %s4
  $region1: #{tpu_custom_call.1} parent=0
    #allocation2 [shape = 'u8[32768]{0}', space=vmem, size = 0x8000, scoped, tag = 'output window, operand 0']
    #allocation3 [shape = 's32[2]{0}', space=sflag, size = 0x8, scoped, tag = 'scoped memory for tpu_custom_call.1']
    %8 = vsyncpa [#allocation3], 0
    %s9 = scalar_lea.sflag [#allocation3], 1
    %10 = vsyncpa %s9, 0
    loop: start=0, step=1, limit=4
    $region2: #{tpu_custom_call.1} parent=1 // loop_pre_header
      _
    $region3: #{tpu_custom_call.1} parent=1 // loop_header
      %s12 = sphi 0, %s16
      %p13 = scmp.ge.s32.totalorder %s12, 4
      %s19 = sphi 0, %s31
      %s20 = sphi 0, %s27
      %s21 = sphi 0, %s19
      %s22 = sphi 0, %s20
      %s23 = sphi 0, %s21
      %s24 = sphi 0, %s22
      %s32 = sphi 0, %s32
      %s34 = sphi 0, %s32
      %s35 = sphi 0, %s34
      %s49 = sphi 0, %s35
      %s57 = sphi 0, %s59
      %s60 = sphi 0, %s57
      %s61 = sphi 0, %s60
      %s77 = sphi 0, %s61
      %s81 = sphi 0, %s81
      %s83 = sphi 0, %s81
      %s84 = sphi 0, %s83
      %s98 = sphi 0, %s84
      %s106 = sphi 0, %s108
      %s109 = sphi 0, %s106
      %s110 = sphi 0, %s109
      %s126 = sphi 0, %s110
    $region4: #{tpu_custom_call.1} parent=1 // loop_header_branch
      %15 = sbr.rel (%p13) target = $region8
    $region5: #{tpu_custom_call.1} parent=1 // loop_body
      %s17 = ssub.s32 %s12, 1
      %s18 = ssub.s32 %s12, 2
      %s25 = sadd.s32 1, %s20
      %p26 = scmp.ge.s32.totalorder %s25, 1
      %s27 = scalar_select %p26, 0, %s25
      %s28 = sadd.s32 1, %s19
      %s29 = scalar_select %p26, %s28, %s19
      %p30 = scmp.ge.s32.totalorder %s29, 2
      %s31 = scalar_select %p30, 0, %s29
      %s33 = sadd.s32 %s32, 1
      %p36 = scmp.eq.s32.totalorder %s12, 1
      %p37 = scmp.ne.s32.totalorder %s32, %s34
      %p38 = scmp.eq.s32.totalorder %s12, 0
      %p39 = por %p37, %p38
      %p40 = scmp.ne.s32.totalorder %s32, %s34
      %p41 = scmp.eq.s32.totalorder %s17, 1
      %p42 = por %p40, %p41
      %p43 = scmp.ne.s32.totalorder %s34, %s35
      %p44 = scmp.eq.s32.totalorder %s17, 0
      %p45 = por %p43, %p44
      %p46 = scmp.ne.s32.totalorder %s34, %s35
      %p47 = scmp.eq.s32.totalorder %s18, 1
      %p48 = por %p46, %p47
      %p50 = scmp.ne.s32.totalorder %s35, %s49
      %p51 = scmp.eq.s32.totalorder %s18, 0
      %p52 = por %p50, %p51
      %s53 = ssub.s32 %s19, %s31
      %s54 = ssub.s32 %s20, %s27
      %s55 = sor.u32 %s53, %s54
      %p56 = scmp.eq.s32.totalorder %s55, 0
      %s58 = sadd.s32 %s57, 1
      %s59 = scalar_select %p56, %s57, %s58
      %p62 = pneg %p56
      %p63 = scmp.eq.s32.totalorder %s12, 1
      %p64 = por %p62, %p63
      %p65 = scmp.ne.s32.totalorder %s57, %s60
      %p66 = scmp.eq.s32.totalorder %s12, 0
      %p67 = por %p65, %p66
      %p68 = scmp.ne.s32.totalorder %s57, %s60
      %p69 = scmp.eq.s32.totalorder %s17, 1
      %p70 = por %p68, %p69
      %p71 = scmp.ne.s32.totalorder %s60, %s61
      %p72 = scmp.eq.s32.totalorder %s17, 0
      %p73 = por %p71, %p72
      %p74 = scmp.ne.s32.totalorder %s60, %s61
      %p75 = scmp.eq.s32.totalorder %s18, 1
      %p76 = por %p74, %p75
      %p78 = scmp.ne.s32.totalorder %s61, %s77
      %p79 = scmp.eq.s32.totalorder %s18, 0
      %p80 = por %p78, %p79
      %s82 = sadd.s32 %s81, 1
      %p85 = scmp.eq.s32.totalorder %s12, 1
      %p86 = scmp.ne.s32.totalorder %s81, %s83
      %p87 = scmp.eq.s32.totalorder %s12, 0
      %p88 = por %p86, %p87
      %p89 = scmp.ne.s32.totalorder %s81, %s83
      %p90 = scmp.eq.s32.totalorder %s17, 1
      %p91 = por %p89, %p90
      %p92 = scmp.ne.s32.totalorder %s83, %s84
      %p93 = scmp.eq.s32.totalorder %s17, 0
      %p94 = por %p92, %p93
      %p95 = scmp.ne.s32.totalorder %s83, %s84
      %p96 = scmp.eq.s32.totalorder %s18, 1
      %p97 = por %p95, %p96
      %p99 = scmp.ne.s32.totalorder %s84, %s98
      %p100 = scmp.eq.s32.totalorder %s18, 0
      %p101 = por %p99, %p100
      %s102 = ssub.s32 %s19, %s31
      %s103 = ssub.s32 %s20, %s27
      %s104 = sor.u32 %s102, %s103
      %p105 = scmp.eq.s32.totalorder %s104, 0
      %s107 = sadd.s32 %s106, 1
      %s108 = scalar_select %p105, %s106, %s107
      %p111 = pneg %p105
      %p112 = scmp.eq.s32.totalorder %s12, 1
      %p113 = por %p111, %p112
      %p114 = scmp.ne.s32.totalorder %s106, %s109
      %p115 = scmp.eq.s32.totalorder %s12, 0
      %p116 = por %p114, %p115
      %p117 = scmp.ne.s32.totalorder %s106, %s109
      %p118 = scmp.eq.s32.totalorder %s17, 1
      %p119 = por %p117, %p118
      %p120 = scmp.ne.s32.totalorder %s109, %s110
      %p121 = scmp.eq.s32.totalorder %s17, 0
      %p122 = por %p120, %p121
      %p123 = scmp.ne.s32.totalorder %s109, %s110
      %p124 = scmp.eq.s32.totalorder %s18, 1
      %p125 = por %p123, %p124
      %p127 = scmp.ne.s32.totalorder %s110, %s126
      %p128 = scmp.eq.s32.totalorder %s18, 0
      %p129 = por %p127, %p128
      %p130 = scmp.le.s32.totalorder 1, %s12
      %p131 = scmp.lt.s32.totalorder %s12, 3
      %p132 = pnand %p130, %p131
      %p133 = pneg %p132
      // Predicated region
      $region9: #{tpu_custom_call.1} parent=5 // pred_check
        _
      $region10: #{tpu_custom_call.1} parent=5 // pred_check_branch
        %135 = sbr.rel (%p132) target = $region12
      $region11: #{tpu_custom_call.1} parent=5 // pred_region
        %s136 = ssub.s32 %s12, 1
        // Predicated region
        $region13: #{tpu_custom_call.1} parent=11 // pred_check
          %p137 = pneg %p45
        $region14: #{tpu_custom_call.1} parent=11 // pred_check_branch
          %139 = sbr.rel (%p137) target = $region16
        $region15: #{tpu_custom_call.1} parent=11 // pred_region
          _
        $region16: #{tpu_custom_call.1} parent=11 // pred_fallthru
          _
        // Predicated region
        $region17: #{tpu_custom_call.1} parent=11 // pred_check
          %p140 = pneg %p94
        $region18: #{tpu_custom_call.1} parent=11 // pred_check_branch
          %142 = sbr.rel (%p140) target = $region20
        $region19: #{tpu_custom_call.1} parent=11 // pred_region
          _
        $region20: #{tpu_custom_call.1} parent=11 // pred_fallthru
          _
      $region12: #{tpu_custom_call.1} parent=5 // pred_fallthru
        _
      %p143 = scmp.lt.s32.totalorder %s12, 2
      // Predicated region
      $region21: #{tpu_custom_call.1} parent=5 // pred_check
        %p144 = pneg %p143
      $region22: #{tpu_custom_call.1} parent=5 // pred_check_branch
        %146 = sbr.rel (%p144) target = $region24
      $region23: #{tpu_custom_call.1} parent=5 // pred_region
        // Predicated region
        $region25: #{tpu_custom_call.1} parent=23 // pred_check
          %p147 = pneg %p67
        $region26: #{tpu_custom_call.1} parent=23 // pred_check_branch
          %149 = sbr.rel (%p147) target = $region28
        $region27: #{tpu_custom_call.1} parent=23 // pred_region
          %s150 = smul.u32 4, %s20
          %p151 = scmp.lt.s32.totalorder %s19, 1
          %s152 = scalar_select %p151, %s19, 1
          %p153 = scmp.lt.s32.totalorder %s150, 3
          %s154 = scalar_select %p153, %s150, 3
          %s155 = smul.addr %s152, 56
          %s156 = sadd.s32 %s154, %s155
          %s157 = smul.addr %s156, 8
          %s158 = scalar_lea.vmem %s1, %s157
          %s159 = smul.u32 4, %s20
        $region28: #{tpu_custom_call.1} parent=23 // pred_fallthru
          _
      $region24: #{tpu_custom_call.1} parent=5 // pred_fallthru
        _
      %p160 = scmp.le.s32.totalorder 1, %s12
      %p161 = scmp.lt.s32.totalorder %s12, 3
      %p162 = pnand %p160, %p161
      %p163 = pneg %p162
      // Predicated region
      $region29: #{tpu_custom_call.1} parent=5 // pred_check
        _
      $region30: #{tpu_custom_call.1} parent=5 // pred_check_branch
        %165 = sbr.rel (%p162) target = $region32
      $region31: #{tpu_custom_call.1} parent=5 // pred_region
        %s166 = ssub.s32 %s12, 1
        %p167 = pneg %p45
        %p168 = pneg %p42
        %s169 = smul.u32 4, %s22
        %p170 = scmp.lt.s32.totalorder %s21, 1
        %s171 = scalar_select %p170, %s21, 1
        %p172 = scmp.lt.s32.totalorder %s169, 3
        %s173 = scalar_select %p172, %s169, 3
        %s174 = smul.addr %s171, 56
        %s175 = sadd.s32 %s173, %s174
        %s176 = smul.addr %s175, 8
        %s177 = scalar_lea.vmem %s1, %s176
        %p178 = pneg %p73
        %p179 = pneg %p70
        %p180 = pneg %p94
        %p181 = pneg %p91
        %p182 = pneg %p122
        %p183 = pneg %p119
        %s184 = sand.u32 %s109, 1
        %s185 = scalar_lea.sflag [#allocation3], %s184
        %s186 = sand.u32 %s109, 1
        %s187 = smul.addr %s186, 32
        %s188 = scalar_lea.vmem [#allocation2], %s187
        %s189 = smul.u32 4, %s22
        %p190 = scmp.lt.s32.totalorder %s21, 1
        %s191 = scalar_select %p190, %s21, 1
        %p192 = scmp.lt.s32.totalorder %s189, 3
        %s193 = scalar_select %p192, %s189, 3
        %s194 = smul.addr %s191, 56
        %s195 = sadd.s32 %s193, %s194
        %s196 = smul.addr %s195, 8
        %s197 = scalar_lea.vmem %s1, %s196
        %s198 = smul.u32 4, %s22
        %s199 = smul.u32 4, %s22
        %v200 = vld [vmem:[%s0] sm:$0xff]
        %v201 = vld [vmem:[%s197] sm:$0xff]
        %v202 = vld [vmem:[%s197 + $0x8] sm:$0xff]
        %v203 = vld [vmem:[%s197 + $0x10] sm:$0xff]
        %v204 = vld [vmem:[%s197 + $0x18] sm:$0xff]
        %v205 = vld [vmem:[%s197 + $0x20] sm:$0xff]
        %v206 = vld [vmem:[%s197 + $0x28] sm:$0xff]
        %v207 = vld [vmem:[%s197 + $0x30] sm:$0xff]
        %v208 = vld [vmem:[%s197 + $0x38] sm:$0xff]
        %v209 = vld [vmem:[%s197 + $0x40] sm:$0xff]
        %v210 = vld [vmem:[%s197 + $0x48] sm:$0xff]
        %v211 = vld [vmem:[%s197 + $0x50] sm:$0xff]
        %v212 = vld [vmem:[%s197 + $0x58] sm:$0xff]
        %v213 = vld [vmem:[%s197 + $0x60] sm:$0xff]
        %v214 = vld [vmem:[%s197 + $0x68] sm:$0xff]
        %v215 = vld [vmem:[%s197 + $0x70] sm:$0xff]
        %v216 = vld [vmem:[%s197 + $0x78] sm:$0xff]
        %v217 = vld [vmem:[%s197 + $0x80] sm:$0xff]
        %v218 = vld [vmem:[%s197 + $0x88] sm:$0xff]
        %v219 = vld [vmem:[%s197 + $0x90] sm:$0xff]
        %v220 = vld [vmem:[%s197 + $0x98] sm:$0xff]
        %v221 = vld [vmem:[%s197 + $0xa0] sm:$0xff]
        %v222 = vld [vmem:[%s197 + $0xa8] sm:$0xff]
        %v223 = vld [vmem:[%s197 + $0xb0] sm:$0xff]
        %v224 = vld [vmem:[%s197 + $0xb8] sm:$0xff]
        %v225 = vld [vmem:[%s197 + $0xc0] sm:$0xff]
        %v226 = vld [vmem:[%s197 + $0xc8] sm:$0xff]
        %v227 = vld [vmem:[%s197 + $0xd0] sm:$0xff]
        %v228 = vld [vmem:[%s197 + $0xd8] sm:$0xff]
        %v229 = vld [vmem:[%s197 + $0xe0] sm:$0xff]
        %v230 = vld [vmem:[%s197 + $0xe8] sm:$0xff]
        %v231 = vld [vmem:[%s197 + $0xf0] sm:$0xff]
        %v232 = vld [vmem:[%s197 + $0xf8] sm:$0xff]
        %v233 = vld [vmem:[%s197 + $0x100] sm:$0xff]
        %v234 = vld [vmem:[%s197 + $0x108] sm:$0xff]
        %v235 = vld [vmem:[%s197 + $0x110] sm:$0xff]
        %v236 = vld [vmem:[%s197 + $0x118] sm:$0xff]
        %v237 = vld [vmem:[%s197 + $0x120] sm:$0xff]
        %v238 = vld [vmem:[%s197 + $0x128] sm:$0xff]
        %v239 = vld [vmem:[%s197 + $0x130] sm:$0xff]
        %v240 = vld [vmem:[%s197 + $0x138] sm:$0xff]
        %v241 = vld [vmem:[%s197 + $0x140] sm:$0xff]
        %v242 = vld [vmem:[%s197 + $0x148] sm:$0xff]
        %v243 = vld [vmem:[%s197 + $0x150] sm:$0xff]
        %v244 = vld [vmem:[%s197 + $0x158] sm:$0xff]
        %v245 = vld [vmem:[%s197 + $0x160] sm:$0xff]
        %v246 = vld [vmem:[%s197 + $0x168] sm:$0xff]
        %v247 = vld [vmem:[%s197 + $0x170] sm:$0xff]
        %v248 = vld [vmem:[%s197 + $0x178] sm:$0xff]
        %v249 = vld [vmem:[%s197 + $0x180] sm:$0xff]
        %v250 = vld [vmem:[%s197 + $0x188] sm:$0xff]
        %v251 = vld [vmem:[%s197 + $0x190] sm:$0xff]
        %v252 = vld [vmem:[%s197 + $0x198] sm:$0xff]
        %v253 = vld [vmem:[%s197 + $0x1a0] sm:$0xf]
        %v254 = vld [vmem:[%s197 + $0x1a8] sm:$0xf]
        %v255 = vld [vmem:[%s197 + $0x1b0] sm:$0xf]
        %v256 = vld [vmem:[%s197 + $0x1b8] sm:$0xf]
        %v257 = vld [vmem:[%s2] sm:$0xff]
        %259 = vset.pattern.permute.xlu0 0
        %260 = vperm.xlu0 %259, %v257
        %v261 = vpop.permute.xlu0 %260
        %vm263 = vcmask 883712
        %v265 = vsel %vm263, %v200, 0
        %vm267 = vcmask 1043456
        %v269 = vsel %vm267, %v253, 0
        %v272 = vsel %vm267, %v254, 0
        %v275 = vsel %vm267, %v255, 0
        %v278 = vsel %vm267, %v256, 0
        %280 = vmatpush.msra.mxu0 0.0
        %281 = vmatpush.msra.mxu0 0.0
        %282 = vmatpush.msra.mxu0 %v269
        %283 = vmatpush.msra.mxu0 %v249
        %284 = vmatpush.msra.mxu0 %v245
        %285 = vmatpush.msra.mxu0 %v241
        %286 = vmatpush.msra.mxu0 %v237
        %287 = vmatpush.msra.mxu0 %v233
        %288 = vmatpush.msra.mxu0 %v229
        %289 = vmatpush.msra.mxu0 %v225
        %290 = vmatpush.msra.mxu0 %v221
        %291 = vmatpush.msra.mxu0 %v217
        %292 = vmatpush.msra.mxu0 %v213
        %293 = vmatpush.msra.mxu0 %v209
        %294 = vmatpush.msra.mxu0 %v205
        %295 = vmatpush.msra.mxu0 %v201
        %296 = vmatmul.f32.gmra.mxu0 %v265
        %v297 = vpop.f32.mrf.mxu0
        %v298 = vadd.f32 %v261, %v297
        %299 = vdwg.mxu0
        %300 = vmatpush.msra.mxu0 0.0
        %301 = vmatpush.msra.mxu0 0.0
        %302 = vmatpush.msra.mxu0 %v272
        %303 = vmatpush.msra.mxu0 %v250
        %304 = vmatpush.msra.mxu0 %v246
        %305 = vmatpush.msra.mxu0 %v242
        %306 = vmatpush.msra.mxu0 %v238
        %307 = vmatpush.msra.mxu0 %v234
        %308 = vmatpush.msra.mxu0 %v230
        %309 = vmatpush.msra.mxu0 %v226
        %310 = vmatpush.msra.mxu0 %v222
        %311 = vmatpush.msra.mxu0 %v218
        %312 = vmatpush.msra.mxu0 %v214
        %313 = vmatpush.msra.mxu0 %v210
        %314 = vmatpush.msra.mxu0 %v206
        %315 = vmatpush.msra.mxu0 %v202
        %316 = vmatmul.f32.gmra.mxu0 %v265
        %v317 = vpop.f32.mrf.mxu0
        %v318 = vadd.f32 %v261, %v317
        %319 = vdwg.mxu0
        %320 = vmatpush.msra.mxu0 0.0
        %321 = vmatpush.msra.mxu0 0.0
        %322 = vmatpush.msra.mxu0 %v275
        %323 = vmatpush.msra.mxu0 %v251
        %324 = vmatpush.msra.mxu0 %v247
        %325 = vmatpush.msra.mxu0 %v243
        %326 = vmatpush.msra.mxu0 %v239
        %327 = vmatpush.msra.mxu0 %v235
        %328 = vmatpush.msra.mxu0 %v231
        %329 = vmatpush.msra.mxu0 %v227
        %330 = vmatpush.msra.mxu0 %v223
        %331 = vmatpush.msra.mxu0 %v219
        %332 = vmatpush.msra.mxu0 %v215
        %333 = vmatpush.msra.mxu0 %v211
        %334 = vmatpush.msra.mxu0 %v207
        %335 = vmatpush.msra.mxu0 %v203
        %336 = vmatmul.f32.gmra.mxu0 %v265
        %v337 = vpop.f32.mrf.mxu0
        %v338 = vadd.f32 %v261, %v337
        %339 = vdwg.mxu0
        %340 = vmatpush.msra.mxu0 0.0
        %341 = vmatpush.msra.mxu0 0.0
        %342 = vmatpush.msra.mxu0 %v278
        %343 = vmatpush.msra.mxu0 %v252
        %344 = vmatpush.msra.mxu0 %v248
        %345 = vmatpush.msra.mxu0 %v244
        %346 = vmatpush.msra.mxu0 %v240
        %347 = vmatpush.msra.mxu0 %v236
        %348 = vmatpush.msra.mxu0 %v232
        %349 = vmatpush.msra.mxu0 %v228
        %350 = vmatpush.msra.mxu0 %v224
        %351 = vmatpush.msra.mxu0 %v220
        %352 = vmatpush.msra.mxu0 %v216
        %353 = vmatpush.msra.mxu0 %v212
        %354 = vmatpush.msra.mxu0 %v208
        %355 = vmatpush.msra.mxu0 %v204
        %356 = vmatmul.f32.gmra.mxu0 %v265
        %v357 = vpop.f32.mrf.mxu0
        %v358 = vadd.f32 %v261, %v357
        %359 = vdwg.mxu0
        %vm360 = vcmp.ge.f32.partialorder %v298, 0.0
        %vm361 = vcmp.ge.f32.partialorder %v318, 0.0
        %vm362 = vcmp.ge.f32.partialorder %v338, 0.0
        %vm363 = vcmp.ge.f32.partialorder %v358, 0.0
        %v364 = vmul.f32 %v298, 0.1
        %v365 = vmul.f32 %v318, 0.1
        %v366 = vmul.f32 %v338, 0.1
        %v367 = vmul.f32 %v358, 0.1
        %v368 = vsel %vm360, %v298, %v364
        %v369 = vsel %vm361, %v318, %v365
        %v370 = vsel %vm362, %v338, %v366
        %v371 = vsel %vm363, %v358, %v367
        %372 = vst [vmem:[%s188] sm:$0xff] %v368
        %373 = vst [vmem:[%s188 + $0x8] sm:$0xff] %v369
        %374 = vst [vmem:[%s188 + $0x10] sm:$0xff] %v370
        %375 = vst [vmem:[%s188 + $0x18] sm:$0xff] %v371
        %s376 = sand.u32 %s109, 1
        %s377 = scalar_lea.sflag [#allocation3], %s376
        %s378 = sand.u32 %s109, 1
        %s379 = smul.addr %s378, 32
        %s380 = scalar_lea.vmem [#allocation2], %s379
        // Predicated region
        $region33: #{tpu_custom_call.1} parent=31 // pred_check
          %p381 = pneg %p119
        $region34: #{tpu_custom_call.1} parent=31 // pred_check_branch
          %383 = sbr.rel (%p381) target = $region36
        $region35: #{tpu_custom_call.1} parent=31 // pred_region
          %s384 = smul.u32 4, %s22
          %386 = vsyncadd %s377, 0
          %s387 = smul.addr %s21, 4
          %s388 = sadd.s32 %s384, %s387
          %s389 = smul.addr %s388, 8
          %s390 = scalar_lea.hbm %s3, %s389
          %s392 = sshll.u32 %s380, 4
          %s393 = int_to_ptr.vmem [resolvable:$true] %s392
          %s394 = sshll.u32 %s390, 4
          %s395 = int_to_ptr.hbm [resolvable:$true] %s394
          %397 = dma.vmem_to_hbm [thread:$0]  %s393, 512, %s395, %s377
        $region36: #{tpu_custom_call.1} parent=31 // pred_fallthru
          _
      $region32: #{tpu_custom_call.1} parent=5 // pred_fallthru
        _
      %p398 = scmp.le.s32.totalorder 2, %s12
      // Predicated region
      $region37: #{tpu_custom_call.1} parent=5 // pred_check
        %p399 = pneg %p398
      $region38: #{tpu_custom_call.1} parent=5 // pred_check_branch
        %401 = sbr.rel (%p399) target = $region40
      $region39: #{tpu_custom_call.1} parent=5 // pred_region
        %s402 = ssub.s32 %s12, 2
        // Predicated region
        $region41: #{tpu_custom_call.1} parent=39 // pred_check
          %p403 = pneg %p125
        $region42: #{tpu_custom_call.1} parent=39 // pred_check_branch
          %405 = sbr.rel (%p403) target = $region44
        $region43: #{tpu_custom_call.1} parent=39 // pred_region
          %s406 = sand.u32 %s110, 1
          %s407 = scalar_lea.sflag [#allocation3], %s406
          %s408 = sand.u32 %s110, 1
          %s409 = smul.addr %s408, 32
          %s410 = scalar_lea.vmem [#allocation2], %s409
          %412 = dma.done %s407, 512
        $region44: #{tpu_custom_call.1} parent=39 // pred_fallthru
          _
      $region40: #{tpu_custom_call.1} parent=5 // pred_fallthru
        _
    $region6: #{tpu_custom_call.1} parent=1 // loop_footer
      %s16 = sadd.s32 1, %s12
    $region7: #{tpu_custom_call.1} parent=1 // loop_footer_branch
      %11 = sbr.rel target = $region3
    $region8: #{tpu_custom_call.1} parent=1 // loop_exit
      _
    %413 = vsyncpa [#allocation3], 1
    %s414 = scalar_lea.sflag [#allocation3], 1
    %415 = vsyncpa %s414, 1

</llo_original>
